<compile_context>
chip_gen: v5e
topology: v5e:2x2
jax: 0.10.0
libtpu: 0.0.40
codegen_flags: <defaults>
</compile_context>

<pallas_src>
import numpy as np
import jax
import jax.numpy as jnp
from jax.experimental import pallas as pl
from jax.experimental.pallas import tpu as pltpu


ALPHA = 4  # model_config.ALPHA (SlowFast default)


def _gather_kernel(idx_ref, x_ref, o_ref):
    # idx_ref is the scalar-prefetch ref (consumed by the index_map);
    # the body is a straight tile copy of the selected slow frame
    # across all channels.
    del idx_ref
    o_ref[...] = x_ref[...]


def _slow_indices(t: int, alpha: int) -> jnp.ndarray:
    # torch.linspace(0, T-1, T//alpha).long(): endpoints included, truncated.
    t_slow = t // alpha
    idx_np = np.linspace(0.0, float(t - 1), t_slow).astype(np.int64)
    return jnp.asarray(idx_np, dtype=jnp.int32)


def pack_pathway(frames: jax.Array, alpha: int = ALPHA):
    """Returns [slow_pathway, fast_pathway] matching PackPathway.forward."""
    C, T, H, W = frames.shape
    t_slow = T // alpha
    indices = _slow_indices(T, alpha)

    lane_dense = (H * W) % 128 == 0
    if lane_dense:
        # Flatten each frame to a lane-dense (H*W//128, 128) slab.
        rows = (H * W) // 128
        x = frames.reshape(C, T, rows, 128)
        blk_tail = (rows, 128)
    else:
        # Fallback: keep the original spatial layout (full-extent last dims).
        x = frames
        blk_tail = (H, W)

    grid_spec = pltpu.PrefetchScalarGridSpec(
        num_scalar_prefetch=1,
        grid=(t_slow,),
        in_specs=[
            # One DMA per slow frame: all channels of the selected source frame.
            pl.BlockSpec((C, 1) + blk_tail, lambda t, idx: (0, idx[t], 0, 0)),
        ],
        out_specs=pl.BlockSpec((C, 1) + blk_tail, lambda t, idx: (0, t, 0, 0)),
    )

    slow = pl.pallas_call(
        _gather_kernel,
        out_shape=jax.ShapeDtypeStruct((C, t_slow) + blk_tail, frames.dtype),
        grid_spec=grid_spec,
        compiler_params=pltpu.CompilerParams(
            dimension_semantics=("parallel",)
        ),
    )(indices, x)

    if lane_dense:
        slow = slow.reshape(C, t_slow, H, W)

    fast_pathway = frames  # identity, exactly as in the reference module
    return [slow, fast_pathway]


def _check(frames: jax.Array, alpha: int = ALPHA):
    C, T, H, W = frames.shape
    t_slow = T // alpha
    slow, fast = pack_pathway(frames, alpha=alpha)
    jax.block_until_ready(slow)
    jax.block_until_ready(fast)

    ref_idx = np.linspace(0.0, float(T - 1), t_slow).astype(np.int64)
    ref_slow = jnp.take(frames, jnp.asarray(ref_idx), axis=1)
    assert slow.shape == (C, t_slow, H, W)
    assert fast.shape == (C, T, H, W)
    np.testing.assert_allclose(np.asarray(slow), np.asarray(ref_slow))
    np.testing.assert_allclose(np.asarray(fast), np.asarray(frames))


if __name__ == "__main__":
    key = jax.random.PRNGKey(0)

    # Lane-dense path (H*W % 128 == 0): 4 channels, 8 frames, 16x16 spatial.
    k0, k1 = jax.random.split(key)
    frames = jax.random.normal(k0, (4, 8, 16, 16), dtype=jnp.float32)
    _check(frames, alpha=ALPHA)

    # Fallback path (H*W not a multiple of 128): odd spatial size.
    frames_odd = jax.random.normal(k1, (3, 8, 6, 10), dtype=jnp.float32)
    _check(frames_odd, alpha=ALPHA)

    print("KERNEL_OK")
</pallas_src>

<mosaic_0001>
module attributes {stable_mosaic.version = 11 : i64} {
  func.func @_gather_kernel(%arg0: i32, %arg1: memref<2xi32, #tpu.memory_space<smem>>, %arg2: memref<4x1x2x128xf32, #tpu.memory_space<vmem>>, %arg3: memref<4x1x2x128xf32, #tpu.memory_space<vmem>>) attributes {dimension_semantics = [#tpu.dimension_semantics<parallel>], iteration_bounds = array<i64: 2>, scalar_prefetch = 1 : i64, scratch_operands = 0 : i64, tpu.core_type = #tpu.core_type<tc>, window_params = [{transform_indices = @transform_0, window_bounds = array<i64: 4, 1, 2, 128>}, {transform_indices = @transform_1, window_bounds = array<i64: 4, 1, 2, 128>}]} {
    %c0 = arith.constant 0 : index
    %c0_0 = arith.constant 0 : index
    %c0_1 = arith.constant 0 : index
    %c0_2 = arith.constant 0 : index
    %0 = vector.load %arg2[%c0, %c0_0, %c0_1, %c0_2] : memref<4x1x2x128xf32, #tpu.memory_space<vmem>>, vector<4x1x2x128xf32>
    %c0_3 = arith.constant 0 : index
    %c0_4 = arith.constant 0 : index
    %c0_5 = arith.constant 0 : index
    %c0_6 = arith.constant 0 : index
    %1 = vector.load %arg3[%c0_3, %c0_4, %c0_5, %c0_6] : memref<4x1x2x128xf32, #tpu.memory_space<vmem>>, vector<4x1x2x128xf32>
    tpu.vector_store %arg3[%c0_3, %c0_4, %c0_5, %c0_6], %0 {strides = array<i32>} : memref<4x1x2x128xf32, #tpu.memory_space<vmem>>, vector<4x1x2x128xf32>,
    return
  }
  func.func @transform_0(%arg0: i32, %arg1: memref<2xi32, #tpu.memory_space<smem>>) -> (i32, i32, i32, i32) {
    %0 = arith.index_cast %arg0 : i32 to index
    %1 = memref.load %arg1[%0] : memref<2xi32, #tpu.memory_space<smem>>
    %c0_i32 = arith.constant 0 : i32
    %c0_i32_0 = arith.constant 0 : i32
    %c0_i32_1 = arith.constant 0 : i32
    %c0_i32_2 = arith.constant 0 : i32
    return %c0_i32, %1, %c0_i32_0, %c0_i32_1 : i32, i32, i32, i32
  }
  func.func @transform_1(%arg0: i32, %arg1: memref<2xi32, #tpu.memory_space<smem>>) -> (i32, i32, i32, i32) {
    %c0_i32 = arith.constant 0 : i32
    %c0_i32_0 = arith.constant 0 : i32
    %c0_i32_1 = arith.constant 0 : i32
    %c0_i32_2 = arith.constant 0 : i32
    return %c0_i32, %arg0, %c0_i32_0, %c0_i32_1 : i32, i32, i32, i32
  }
}

</mosaic_0001>

<llo_original>
// kernel: tpu_custom_call.1
$region0: #{tpu_custom_call.1}
  #allocation0 [shape = 'u32[]', space=smem, size = 0x4, offset = 0x4, fixed_abs, tag = 'smem constant byte address 0x4 - core index']
  #allocation1 [shape = 'u32[72,128]{1,0:T(1,128)}', space=vmem, size = 0x9000, scoped, tag = 'internal scratch']
  #allocation2 [shape = 's32[1]{0}', space=sflag, size = 0x4, scoped, tag = 'scoped memory for tpu_custom_call.1']
  #allocation3 [shape = 'u8[512]{0}', space=smem, size = 0x200, scoped, tag = 'prefetched SMEM operand 0']
  %s0 = inlined_call_operand.hbm [shape: s32[2], index: 0, kind: input, shape index: {}]
  %s1 = inlined_call_operand.hbm [shape: f32[4,8,2,128], index: 1, kind: input, shape index: {}]
  %s2 = inlined_call_operand.hbm [shape: f32[4,2,2,128], index: 2, kind: output, shape index: {}]
  %s3 = sld [smem:[#allocation0]]
  $region41: #{tpu_custom_call.1} parent=0
    _
  %s5 = ssub.s32 1, %s3
  %s6 = scalar_select 0, %s5, %s3
  %s8 = sshll.u32 %s0, 4
  %s9 = int_to_ptr.hbm [resolvable:$true] %s8
  %11 = dma.hbm_to_smem %s9, 16, [#allocation3], [#allocation2]
  %13 = dma.done [#allocation2], 16
  %14 = sfence
  $region1: #{tpu_custom_call.1} parent=0
    #allocation4 [shape = 'u8[8192]{0}', space=vmem, size = 0x2000, scoped, tag = 'input window, operand 1']
    #allocation5 [shape = 's32[2]{0}', space=sflag, size = 0x8, scoped, tag = 'scoped memory for tpu_custom_call.1']
    #allocation6 [shape = 's32[2]{0}', space=sflag, size = 0x8, scoped, tag = 'scoped memory for tpu_custom_call.1']
    #allocation7 [shape = 'u8[8192]{0}', space=vmem, size = 0x2000, scoped, tag = 'output window, operand 0']
    %15 = vsyncpa [#allocation5], 0
    %s16 = scalar_lea.sflag [#allocation5], 1
    %17 = vsyncpa %s16, 0
    %18 = vsyncpa [#allocation6], 0
    %s19 = scalar_lea.sflag [#allocation6], 1
    %20 = vsyncpa %s19, 0
    loop: start=0, step=1, limit=4
    $region2: #{tpu_custom_call.1} parent=1 // loop_pre_header
      _
    $region3: #{tpu_custom_call.1} parent=1 // loop_header
      %s22 = sphi 0, %s26
      %p23 = scmp.ge.s32.totalorder %s22, 4
      %s34 = sphi 0, %s36
      %s37 = sphi 0, %s34
      %s38 = sphi 0, %s37
      %s54 = sphi 0, %s38
      %s60 = sphi 0, %s62
      %s63 = sphi 0, %s60
      %s64 = sphi 0, %s63
      %s80 = sphi 0, %s64
    $region4: #{tpu_custom_call.1} parent=1 // loop_header_branch
      %25 = sbr.rel (%p23) target = $region8
    $region5: #{tpu_custom_call.1} parent=1 // loop_body
      %s27 = ssub.s32 %s22, 1
      %s28 = ssub.s32 %s22, 2
      %s29 = sadd.s32 %s22, 1
      %s30 = sld [smem:[#allocation3 + %s22]]
      %s31 = sld [smem:[#allocation3 + %s29]]
      %s32 = ssub.s32 %s30, %s31
      %p33 = scmp.eq.s32.totalorder %s32, 0
      %s35 = sadd.s32 %s34, 1
      %s36 = scalar_select %p33, %s34, %s35
      %p39 = pneg %p33
      %p40 = scmp.eq.s32.totalorder %s22, 1
      %p41 = por %p39, %p40
      %p42 = scmp.ne.s32.totalorder %s34, %s37
      %p43 = scmp.eq.s32.totalorder %s22, 0
      %p44 = por %p42, %p43
      %p45 = scmp.ne.s32.totalorder %s34, %s37
      %p46 = scmp.eq.s32.totalorder %s27, 1
      %p47 = por %p45, %p46
      %p48 = scmp.ne.s32.totalorder %s37, %s38
      %p49 = scmp.eq.s32.totalorder %s27, 0
      %p50 = por %p48, %p49
      %p51 = scmp.ne.s32.totalorder %s37, %s38
      %p52 = scmp.eq.s32.totalorder %s28, 1
      %p53 = por %p51, %p52
      %p55 = scmp.ne.s32.totalorder %s38, %s54
      %p56 = scmp.eq.s32.totalorder %s28, 0
      %p57 = por %p55, %p56
      %s58 = ssub.s32 %s22, %s29
      %p59 = scmp.eq.s32.totalorder %s58, 0
      %s61 = sadd.s32 %s60, 1
      %s62 = scalar_select %p59, %s60, %s61
      %p65 = pneg %p59
      %p66 = scmp.eq.s32.totalorder %s22, 1
      %p67 = por %p65, %p66
      %p68 = scmp.ne.s32.totalorder %s60, %s63
      %p69 = scmp.eq.s32.totalorder %s22, 0
      %p70 = por %p68, %p69
      %p71 = scmp.ne.s32.totalorder %s60, %s63
      %p72 = scmp.eq.s32.totalorder %s27, 1
      %p73 = por %p71, %p72
      %p74 = scmp.ne.s32.totalorder %s63, %s64
      %p75 = scmp.eq.s32.totalorder %s27, 0
      %p76 = por %p74, %p75
      %p77 = scmp.ne.s32.totalorder %s63, %s64
      %p78 = scmp.eq.s32.totalorder %s28, 1
      %p79 = por %p77, %p78
      %p81 = scmp.ne.s32.totalorder %s64, %s80
      %p82 = scmp.eq.s32.totalorder %s28, 0
      %p83 = por %p81, %p82
      %p84 = scmp.le.s32.totalorder 1, %s22
      %p85 = scmp.lt.s32.totalorder %s22, 3
      %p86 = pnand %p84, %p85
      %p87 = pneg %p86
      // Predicated region
      $region9: #{tpu_custom_call.1} parent=5 // pred_check
        _
      $region10: #{tpu_custom_call.1} parent=5 // pred_check_branch
        %89 = sbr.rel (%p86) target = $region12
      $region11: #{tpu_custom_call.1} parent=5 // pred_region
        %s90 = ssub.s32 %s22, 1
      $region12: #{tpu_custom_call.1} parent=5 // pred_fallthru
        _
      %p91 = scmp.lt.s32.totalorder %s22, 2
      // Predicated region
      $region13: #{tpu_custom_call.1} parent=5 // pred_check
        %p92 = pneg %p91
      $region14: #{tpu_custom_call.1} parent=5 // pred_check_branch
        %94 = sbr.rel (%p92) target = $region16
      $region15: #{tpu_custom_call.1} parent=5 // pred_region
        // Predicated region
        $region17: #{tpu_custom_call.1} parent=15 // pred_check
          %p95 = pneg %p44
        $region18: #{tpu_custom_call.1} parent=15 // pred_check_branch
          %97 = sbr.rel (%p95) target = $region20
        $region19: #{tpu_custom_call.1} parent=15 // pred_region
          %s98 = sand.u32 %s34, 1
          %s99 = scalar_lea.sflag [#allocation5], %s98
          %s100 = sand.u32 %s34, 1
          %s101 = smul.addr %s100, 8
          %s102 = scalar_lea.vmem [#allocation4], %s101
          %s103 = sld [smem:[#allocation3 + %s22]]
          %105 = vsyncadd %s99, 0
          %s106 = smul.addr %s103, 2
          %s107 = scalar_lea.hbm %s1, %s106
          %s108 = sshll.u32 %s107, 4
          %s109 = int_to_ptr.hbm [resolvable:$true] %s108
          %s110 = sshll.u32 %s102, 4
          %s111 = int_to_ptr.vmem [resolvable:$true] %s110
          %116 = dma.hbm_to_vmem [thread:$0]  %s109, 128, %s111, %s99, 256, 32, 2
        $region20: #{tpu_custom_call.1} parent=15 // pred_fallthru
          _
      $region16: #{tpu_custom_call.1} parent=5 // pred_fallthru
        _
      %p117 = scmp.le.s32.totalorder 1, %s22
      %p118 = scmp.lt.s32.totalorder %s22, 3
      %p119 = pnand %p117, %p118
      %p120 = pneg %p119
      // Predicated region
      $region21: #{tpu_custom_call.1} parent=5 // pred_check
        _
      $region22: #{tpu_custom_call.1} parent=5 // pred_check_branch
        %122 = sbr.rel (%p119) target = $region24
      $region23: #{tpu_custom_call.1} parent=5 // pred_region
        %s123 = ssub.s32 %s22, 1
        %s124 = sand.u32 %s37, 1
        %s125 = scalar_lea.sflag [#allocation5], %s124
        %s126 = sand.u32 %s37, 1
        %s127 = smul.addr %s126, 8
        %s128 = scalar_lea.vmem [#allocation4], %s127
        // Predicated region
        $region25: #{tpu_custom_call.1} parent=23 // pred_check
          %p129 = pneg %p50
        $region26: #{tpu_custom_call.1} parent=23 // pred_check_branch
          %131 = sbr.rel (%p129) target = $region28
        $region27: #{tpu_custom_call.1} parent=23 // pred_region
          %133 = dma.done %s125, 128
        $region28: #{tpu_custom_call.1} parent=23 // pred_fallthru
          _
        %s134 = sand.u32 %s37, 1
        %s135 = scalar_lea.sflag [#allocation5], %s134
        %s136 = sand.u32 %s37, 1
        %s137 = smul.addr %s136, 8
        %s138 = scalar_lea.vmem [#allocation4], %s137
        %p139 = pneg %p50
        %p140 = pneg %p47
        %p141 = pneg %p76
        %p142 = pneg %p73
        %s143 = sand.u32 %s63, 1
        %s144 = scalar_lea.sflag [#allocation6], %s143
        %s145 = sand.u32 %s63, 1
        %s146 = smul.addr %s145, 8
        %s147 = scalar_lea.vmem [#allocation7], %s146
        %s148 = sld [smem:[#allocation3 + %s27]]
        %v149 = vld [vmem:[%s128] sm:$0x3]
        %v150 = vld [vmem:[%s128 + $0x2] sm:$0x3]
        %v151 = vld [vmem:[%s128 + $0x4] sm:$0x3]
        %v152 = vld [vmem:[%s128 + $0x6] sm:$0x3]
        %153 = vst [vmem:[%s147] sm:$0x3] %v149
        %154 = vst [vmem:[%s147 + $0x2] sm:$0x3] %v150
        %155 = vst [vmem:[%s147 + $0x4] sm:$0x3] %v151
        %156 = vst [vmem:[%s147 + $0x6] sm:$0x3] %v152
        %s157 = sand.u32 %s63, 1
        %s158 = scalar_lea.sflag [#allocation6], %s157
        %s159 = sand.u32 %s63, 1
        %s160 = smul.addr %s159, 8
        %s161 = scalar_lea.vmem [#allocation7], %s160
        // Predicated region
        $region29: #{tpu_custom_call.1} parent=23 // pred_check
          %p162 = pneg %p73
        $region30: #{tpu_custom_call.1} parent=23 // pred_check_branch
          %164 = sbr.rel (%p162) target = $region32
        $region31: #{tpu_custom_call.1} parent=23 // pred_region
          %166 = vsyncadd %s158, 0
          %s167 = smul.addr %s27, 2
          %s168 = scalar_lea.hbm %s2, %s167
          %s169 = sshll.u32 %s161, 4
          %s170 = int_to_ptr.vmem [resolvable:$true] %s169
          %s171 = sshll.u32 %s168, 4
          %s172 = int_to_ptr.hbm [resolvable:$true] %s171
          %177 = dma.vmem_to_hbm [thread:$0]  %s170, 128, %s172, %s158, 32, 64, 2
        $region32: #{tpu_custom_call.1} parent=23 // pred_fallthru
          _
      $region24: #{tpu_custom_call.1} parent=5 // pred_fallthru
        _
      %p178 = scmp.le.s32.totalorder 2, %s22
      // Predicated region
      $region33: #{tpu_custom_call.1} parent=5 // pred_check
        %p179 = pneg %p178
      $region34: #{tpu_custom_call.1} parent=5 // pred_check_branch
        %181 = sbr.rel (%p179) target = $region36
      $region35: #{tpu_custom_call.1} parent=5 // pred_region
        %s182 = ssub.s32 %s22, 2
        // Predicated region
        $region37: #{tpu_custom_call.1} parent=35 // pred_check
          %p183 = pneg %p79
        $region38: #{tpu_custom_call.1} parent=35 // pred_check_branch
          %185 = sbr.rel (%p183) target = $region40
        $region39: #{tpu_custom_call.1} parent=35 // pred_region
          %s186 = sand.u32 %s64, 1
          %s187 = scalar_lea.sflag [#allocation6], %s186
          %s188 = sand.u32 %s64, 1
          %s189 = smul.addr %s188, 8
          %s190 = scalar_lea.vmem [#allocation7], %s189
          %192 = dma.done %s187, 128
        $region40: #{tpu_custom_call.1} parent=35 // pred_fallthru
          _
      $region36: #{tpu_custom_call.1} parent=5 // pred_fallthru
        _
    $region6: #{tpu_custom_call.1} parent=1 // loop_footer
      %s26 = sadd.s32 1, %s22
    $region7: #{tpu_custom_call.1} parent=1 // loop_footer_branch
      %21 = sbr.rel target = $region3
    $region8: #{tpu_custom_call.1} parent=1 // loop_exit
      _
    %193 = vsyncpa [#allocation5], 1
    %s194 = scalar_lea.sflag [#allocation5], 1
    %195 = vsyncpa %s194, 1
    %196 = vsyncpa [#allocation6], 1
    %s197 = scalar_lea.sflag [#allocation6], 1
    %198 = vsyncpa %s197, 1

</llo_original>
